<compile_context>
chip_gen: v7x
topology: tpu7x:2x2x1
jax: 0.10.0
libtpu: 0.0.40
codegen_flags: <defaults>
</compile_context>

<pallas_src>
import math

import jax
import jax.numpy as jnp
from jax.experimental import pallas as pl
from jax.experimental.pallas import tpu as pltpu


# Per-DMA granule: ~4 MiB chunks are large enough that DMA-issue overhead is
# negligible at 0.8-3.2 TB/s HBM bandwidth, and up to _MAX_INFLIGHT of them
# keep several DMA queues busy.  Nothing passes through VMEM, so this needs
# no per-generation (v5e/v6e/v7x) retuning.
_TARGET_CHUNK_BYTES = 4 * 1024 * 1024
_MAX_INFLIGHT = 8


def _cdiv(a: int, b: int) -> int:
    return -(-a // b)


def _round_up(x: int, m: int) -> int:
    return ((x + m - 1) // m) * m


def _make_chunks(batch: int, flat: int, itemsize: int):
    """Static (axis, [(start, size), ...]) chunking of a (batch, flat) copy.

    Prefers fully contiguous row-range chunks (axis 0); falls back to
    128-aligned lane-range chunks (axis 1) when the batch is too small to
    split.  Never requires exact divisibility -- the last chunk may be ragged.
    """
    total_bytes = batch * flat * itemsize
    want = max(1, min(_MAX_INFLIGHT, _cdiv(total_bytes, _TARGET_CHUNK_BYTES)))
    if want == 1:
        return 0, [(0, batch)]
    if batch >= want:
        rows = _cdiv(batch, want)
        return 0, [(s, min(rows, batch - s)) for s in range(0, batch, rows)]
    cols = _cdiv(flat, want)
    if flat >= 128:
        cols = _round_up(cols, 128)
    return 1, [(s, min(cols, flat - s)) for s in range(0, flat, cols)]


def flatten(x: jax.Array) -> jax.Array:
    """Pallas equivalent of torch's x.view(x.size(0), -1)."""
    batch = int(x.shape[0])
    flat = int(math.prod(x.shape[1:]))

    # Metadata-only reshape in the wrapper: both kernel operands already have
    # the 2-D output shape, so the kernel is a pure copy.
    x2d = x.reshape(batch, flat)

    itemsize = jnp.dtype(x.dtype).itemsize
    axis, chunks = _make_chunks(batch, flat, itemsize)
    n_chunks = len(chunks)

    def kernel(x_hbm, o_hbm, sems):
        # Issue all chunked HBM->HBM copies, then wait.  Up to _MAX_INFLIGHT
        # DMAs are in flight at once; no data ever passes through VMEM.
        copies = []
        for idx, (start, size) in enumerate(chunks):
            if n_chunks == 1:
                src, dst = x_hbm, o_hbm          # whole-array contiguous copy
            elif axis == 0:
                src = x_hbm.at[pl.ds(start, size), :]
                dst = o_hbm.at[pl.ds(start, size), :]
            else:
                src = x_hbm.at[:, pl.ds(start, size)]
                dst = o_hbm.at[:, pl.ds(start, size)]
            cp = pltpu.make_async_copy(src, dst, sems.at[idx])
            cp.start()
            copies.append(cp)
        for cp in copies:
            cp.wait()

    cost = pl.CostEstimate(
        flops=0,
        transcendentals=0,
        bytes_accessed=2 * batch * flat * itemsize,
    )

    return pl.pallas_call(
        kernel,
        out_shape=jax.ShapeDtypeStruct((batch, flat), x.dtype),
        in_specs=[pl.BlockSpec(memory_space=pl.ANY)],
        out_specs=pl.BlockSpec(memory_space=pl.ANY),
        scratch_shapes=[pltpu.SemaphoreType.DMA((n_chunks,))],
        cost_estimate=cost,
    )(x2d)


if __name__ == "__main__":
    key = jax.random.PRNGKey(0)
    # NCHW conv feature map fed to Flatten, matching the PyTorch module.
    x = jax.random.normal(key, (2, 4, 16, 16), dtype=jnp.float32)

    y = flatten(x)
    jax.block_until_ready(y)

    # Reference: plain reshape (== torch .view semantics on contiguous NCHW).
    y_ref = x.reshape(x.shape[0], -1)
    assert y.shape == (2, 4 * 16 * 16), y.shape
    assert y.dtype == x.dtype
    assert jnp.array_equal(y, y_ref), "Flatten kernel mismatch vs reference"

    print("KERNEL_OK")
</pallas_src>

<mosaic_0001>
module attributes {stable_mosaic.version = 11 : i64} {
  func.func @kernel(%arg0: memref<2x1024xf32, #tpu.memory_space<any>>, %arg1: memref<2x1024xf32, #tpu.memory_space<any>>, %arg2: memref<1x!tpu.dma_semaphore, #tpu.memory_space<semaphore_mem>>) attributes {dimension_semantics = [], scalar_prefetch = 0 : i64, scratch_operands = 1 : i64, tpu.core_type = #tpu.core_type<tc>} {
    %c0_i32 = arith.constant 0 : i32
    %0 = tpu.memref_slice %arg2[%c0_i32] : memref<1x!tpu.dma_semaphore, #tpu.memory_space<semaphore_mem>> -> memref<1x!tpu.dma_semaphore, #tpu.memory_space<semaphore_mem>>
    %1 = tpu.memref_squeeze %0 : memref<1x!tpu.dma_semaphore, #tpu.memory_space<semaphore_mem>> -> memref<!tpu.dma_semaphore, #tpu.memory_space<semaphore_mem>>
    tpu.enqueue_dma source(%arg0 : memref<2x1024xf32, #tpu.memory_space<any>>) target(%arg1 : memref<2x1024xf32, #tpu.memory_space<any>>) target_semaphore(%1 : memref<!tpu.dma_semaphore, #tpu.memory_space<semaphore_mem>>)
    %c0_i32_0 = arith.constant 0 : i32
    %2 = tpu.memref_slice %arg2[%c0_i32_0] : memref<1x!tpu.dma_semaphore, #tpu.memory_space<semaphore_mem>> -> memref<1x!tpu.dma_semaphore, #tpu.memory_space<semaphore_mem>>
    %3 = tpu.memref_squeeze %2 : memref<1x!tpu.dma_semaphore, #tpu.memory_space<semaphore_mem>> -> memref<!tpu.dma_semaphore, #tpu.memory_space<semaphore_mem>>
    tpu.wait_dma2 semaphore(%3 : memref<!tpu.dma_semaphore, #tpu.memory_space<semaphore_mem>>) src(%arg0 : memref<2x1024xf32, #tpu.memory_space<any>>) dst(%arg1 : memref<2x1024xf32, #tpu.memory_space<any>>)
    return
  }
}

</mosaic_0001>

<llo_original>
// kernel: tpu_custom_call.1
$region0: #{tpu_custom_call.1}
  #allocation0 [shape = 'u32[]', space=smem, size = 0x4, offset = 0x4, fixed_abs, tag = 'smem constant byte address 0x4 - core index']
  #allocation1 [shape = 'u32[144,128]{1,0:T(1,128)}', space=vmem, size = 0x12000, scoped, tag = 'internal scratch']
  #allocation2 [shape = 's32[1]{0}', space=sflag, size = 0x4, scoped, tag = 'scratch operand']
  #allocation3 [shape = 's32[]', space=sflag, size = 0x4, offset = 0, fixed_abs, tag = 'sflag constant byte address 0x0 - dummy sync flag']
  #allocation4 [shape = 'u32[0]{0}', space=smem, size = 0, offset = 0, fixed_abs, tag = 'smem constant byte address 0x0 - null']
  %s0 = inlined_call_operand.hbm [shape: f32[2,1024], index: 0, kind: input, shape index: {}]
  %s1 = inlined_call_operand.hbm [shape: f32[2,1024], index: 1, kind: output, shape index: {}]
  %s2 = sld [smem:[#allocation0]]
  $region2: #{tpu_custom_call.1} parent=0
    _
  %s4 = ssub.s32 1, %s2
  %s5 = scalar_select 0, %s4, %s2
  %s7 = sshll.u32 1, 14
  %s8 = sxor.u32 4294967295, %s7
  %s11 = sshll.u32 3, 24
  %s12 = sxor.u32 4294967295, %s11
  %s13 = sand.u32 0, %s12
  %s15 = sor.u32 %s13, 0
  %18 = dma.general %s0, 256, %s1, [#allocation2], [#allocation3], [#allocation4], %s15, 0
  %s19 = smul.u32 2, 1
  %s20 = smul.u32 %s19, 8
  %s21 = sshll.u32 %s20, 4
  %22 = dma.done [#allocation2], %s21
  %23 = vsyncmov [#allocation2]
  %s24 = vpop.sfrf %23
  %p25 = scmp.eq.s32.totalorder %s24, 0
  %p26 = pneg %p25
  %28 = shalt.err (%p26)

</llo_original>
